<compile_context>
chip_gen: v5e
topology: v5e:2x2
jax: 0.10.0
libtpu: 0.0.40
codegen_flags: <defaults>
</compile_context>

<pallas_src>
import math

import jax
import jax.numpy as jnp
from jax.experimental import pallas as pl
from jax.experimental.pallas import tpu as pltpu


def _normalize_size(size, total):
    """Resolve a possible -1 dimension, torch.view style."""
    size = tuple(int(s) for s in size)
    if -1 in size:
        idx = size.index(-1)
        rest = math.prod(s for i, s in enumerate(size) if i != idx)
        assert rest > 0 and total % rest == 0, "cannot infer -1 dimension"
        size = size[:idx] + (total // rest,) + size[idx + 1:]
    assert math.prod(size) == total, "reshape size mismatch"
    return size


def _make_dma_copy_kernel(chunk_bounds):
    """Kernel body: direct HBM->HBM DMA of the whole buffer, in a few chunks.

    `chunk_bounds` is a static tuple of (start, length) slices along dim 0.
    """

    def kernel(x_hbm, o_hbm, sems):
        if len(chunk_bounds) == 1:
            cp = pltpu.make_async_copy(x_hbm, o_hbm, sems.at[0])
            cp.start()
            cp.wait()
        else:
            copies = [
                pltpu.make_async_copy(
                    x_hbm.at[pl.ds(start, length)],
                    o_hbm.at[pl.ds(start, length)],
                    sems.at[c],
                )
                for c, (start, length) in enumerate(chunk_bounds)
            ]
            # Start all DMAs first so several are in flight, then wait.
            for cp in copies:
                cp.start()
            for cp in copies:
                cp.wait()

    return kernel


def pallas_reshape(
    x,
    size,
    *,
    materialize=True,
    max_chunks=8,
    min_chunk_bytes=2 * 1024 * 1024,
):
    """Equivalent of torch `x.view_(size)`.

    materialize=True  -> Pallas HBM->HBM DMA copy into a fresh buffer.
    materialize=False -> metadata-only jnp.reshape (zero HBM traffic).
    """
    total = math.prod(x.shape)
    size = _normalize_size(size, total)

    if not materialize or total == 0:
        # Row-major reshape is metadata-only in XLA: zero HBM traffic.
        return jnp.reshape(x, size)

    # Shape the DMA over the target shape (0-d targets get a (1,) work shape).
    work_shape = size if len(size) >= 1 else (1,)
    x_r = jnp.reshape(x, work_shape)  # metadata-only for contiguous inputs

    itemsize = jnp.dtype(x.dtype).itemsize
    total_bytes = total * itemsize

    # Split along the leading dim into a few DMAs (each >= min_chunk_bytes)
    # so multiple transfers are outstanding; small arrays use one DMA.
    lead = work_shape[0]
    n_chunks = max(
        1, min(max_chunks, lead, total_bytes // max(1, min_chunk_bytes))
    )
    base, rem = divmod(lead, n_chunks)
    chunk_bounds = []
    start = 0
    for c in range(n_chunks):
        length = base + (1 if c < rem else 0)
        chunk_bounds.append((start, length))
        start += length
    chunk_bounds = tuple(chunk_bounds)

    out = pl.pallas_call(
        _make_dma_copy_kernel(chunk_bounds),
        out_shape=jax.ShapeDtypeStruct(work_shape, x.dtype),
        in_specs=[pl.BlockSpec(memory_space=pl.ANY)],
        out_specs=pl.BlockSpec(memory_space=pl.ANY),
        scratch_shapes=[pltpu.SemaphoreType.DMA((n_chunks,))],
        cost_estimate=pl.CostEstimate(
            flops=0, transcendentals=0, bytes_accessed=2 * total_bytes
        ),
    )(x_r)

    return jnp.reshape(out, size)  # metadata-only (no-op when shapes match)


if __name__ == "__main__":
    key = jax.random.PRNGKey(0)

    # --- Main case: NCHW activation (batch=2, channels=4, 16, 16) -> (2, 4, 256)
    x = jax.random.normal(key, (2, 4, 16, 16), dtype=jnp.float32)
    target_size = (2, 4, 256)
    y = jax.block_until_ready(pallas_reshape(x, target_size))
    ref = jnp.reshape(x, target_size)
    assert y.shape == tuple(target_size)
    assert y.dtype == x.dtype
    assert bool(jnp.array_equal(y, ref))

    # --- -1 inference (torch.view semantics)
    y_inf = jax.block_until_ready(pallas_reshape(x, (2, -1, 256)))
    assert y_inf.shape == (2, 4, 256)
    assert bool(jnp.array_equal(y_inf, ref))

    # --- Lane-unfriendly element count (105 elems): no pad / extra HBM pass.
    k2 = jax.random.PRNGKey(1)
    x_odd = jax.random.normal(k2, (3, 5, 7), dtype=jnp.float32)
    y_odd = jax.block_until_ready(pallas_reshape(x_odd, (5, 21)))
    assert bool(jnp.array_equal(y_odd, jnp.reshape(x_odd, (5, 21))))

    # --- Multi-DMA chunked path (force small chunks so dim 0 splits into 8).
    k3 = jax.random.PRNGKey(2)
    x2 = jax.random.normal(k3, (2, 4, 40, 128), dtype=jnp.float32)
    y2 = jax.block_until_ready(
        pallas_reshape(x2, (8, 5120), min_chunk_bytes=4 * 1024)
    )
    assert bool(jnp.array_equal(y2, jnp.reshape(x2, (8, 5120))))

    # --- Sub-32-bit dtype path (bf16)
    x3 = jax.random.normal(key, (2, 4, 16, 16), dtype=jnp.bfloat16)
    y3 = jax.block_until_ready(pallas_reshape(x3, (2, 4, 256)))
    assert y3.dtype == jnp.bfloat16
    assert bool(jnp.array_equal(y3, jnp.reshape(x3, (2, 4, 256))))

    # --- 1-D target
    y4 = jax.block_until_ready(pallas_reshape(x, (2048,)))
    assert bool(jnp.array_equal(y4, jnp.reshape(x, (2048,))))

    # --- Metadata-only short-circuit path
    y5 = jax.block_until_ready(pallas_reshape(x, target_size, materialize=False))
    assert bool(jnp.array_equal(y5, ref))

    print("KERNEL_OK")
</pallas_src>

<mosaic_0001>
module attributes {stable_mosaic.version = 11 : i64} {
  func.func @kernel(%arg0: memref<2x4x256xf32, #tpu.memory_space<any>>, %arg1: memref<2x4x256xf32, #tpu.memory_space<any>>, %arg2: memref<1x!tpu.dma_semaphore, #tpu.memory_space<semaphore_mem>>) attributes {dimension_semantics = [], scalar_prefetch = 0 : i64, scratch_operands = 1 : i64, tpu.core_type = #tpu.core_type<tc>} {
    %c0_i32 = arith.constant 0 : i32
    %0 = tpu.memref_slice %arg2[%c0_i32] : memref<1x!tpu.dma_semaphore, #tpu.memory_space<semaphore_mem>> -> memref<1x!tpu.dma_semaphore, #tpu.memory_space<semaphore_mem>>
    %1 = tpu.memref_squeeze %0 : memref<1x!tpu.dma_semaphore, #tpu.memory_space<semaphore_mem>> -> memref<!tpu.dma_semaphore, #tpu.memory_space<semaphore_mem>>
    tpu.enqueue_dma source(%arg0 : memref<2x4x256xf32, #tpu.memory_space<any>>) target(%arg1 : memref<2x4x256xf32, #tpu.memory_space<any>>) target_semaphore(%1 : memref<!tpu.dma_semaphore, #tpu.memory_space<semaphore_mem>>)
    %c0_i32_0 = arith.constant 0 : i32
    %2 = tpu.memref_slice %arg2[%c0_i32_0] : memref<1x!tpu.dma_semaphore, #tpu.memory_space<semaphore_mem>> -> memref<1x!tpu.dma_semaphore, #tpu.memory_space<semaphore_mem>>
    %3 = tpu.memref_squeeze %2 : memref<1x!tpu.dma_semaphore, #tpu.memory_space<semaphore_mem>> -> memref<!tpu.dma_semaphore, #tpu.memory_space<semaphore_mem>>
    tpu.wait_dma2 semaphore(%3 : memref<!tpu.dma_semaphore, #tpu.memory_space<semaphore_mem>>) src(%arg0 : memref<2x4x256xf32, #tpu.memory_space<any>>) dst(%arg1 : memref<2x4x256xf32, #tpu.memory_space<any>>)
    return
  }
}

</mosaic_0001>

<llo_original>
// kernel: tpu_custom_call.1
$region0: #{tpu_custom_call.1}
  #allocation0 [shape = 'u32[]', space=smem, size = 0x4, offset = 0x4, fixed_abs, tag = 'smem constant byte address 0x4 - core index']
  #allocation1 [shape = 'u32[72,128]{1,0:T(1,128)}', space=vmem, size = 0x9000, scoped, tag = 'internal scratch']
  #allocation2 [shape = 's32[1]{0}', space=sflag, size = 0x4, scoped, tag = 'scratch operand']
  #allocation3 [shape = 's32[]', space=sflag, size = 0x4, offset = 0, fixed_abs, tag = 'sflag constant byte address 0x0 - dummy sync flag']
  #allocation4 [shape = 'u32[0]{0}', space=smem, size = 0, offset = 0, fixed_abs, tag = 'smem constant byte address 0x0 - null']
  %s0 = inlined_call_operand.hbm [shape: f32[2,4,256], index: 0, kind: input, shape index: {}]
  %s1 = inlined_call_operand.hbm [shape: f32[2,4,256], index: 1, kind: output, shape index: {}]
  %s2 = sld [smem:[#allocation0]]
  $region2: #{tpu_custom_call.1} parent=0
    _
  %s4 = ssub.s32 1, %s2
  %s5 = scalar_select 0, %s4, %s2
  %s7 = sshll.u32 1, 14
  %s8 = sxor.u32 4294967295, %s7
  %s10 = sshll.u32 %s0, 4
  %s11 = int_to_ptr.hbm [resolvable:$true] %s10
  %s12 = sshll.u32 %s1, 4
  %s13 = int_to_ptr.hbm [resolvable:$true] %s12
  %16 = dma.general %s11, 256, %s13, [#allocation2], [#allocation3], [#allocation4], 0, 0
  %s17 = smul.u32 4, 2
  %s18 = smul.u32 %s17, 1
  %s19 = smul.u32 %s18, 2
  %s20 = sshll.u32 %s19, 4
  %21 = dma.done [#allocation2], %s20
  %22 = vsyncmov [#allocation2]
  %s23 = vpop.sfrf %22
  %p24 = scmp.eq.s32.totalorder %s23, 0
  %p25 = pneg %p24
  %27 = shalt.err (%p25)

</llo_original>
